<compile_context>
chip_gen: v7x
topology: tpu7x:2x2x1
jax: 0.10.0
libtpu: 0.0.40
codegen_flags: <defaults>
</compile_context>

<pallas_src>
import functools
import numpy as np

import jax
import jax.numpy as jnp
from jax.experimental import pallas as pl
from jax.experimental.pallas import tpu as pltpu


LANE = 128
VMEM_SPEC = pl.BlockSpec(memory_space=pltpu.MemorySpace.VMEM)


def _round_up(x, m):
    return (x + m - 1) // m * m


def _pad_last(a, width):
    pad = width - a.shape[-1]
    if pad == 0:
        return a
    return jnp.pad(a, [(0, 0)] * (a.ndim - 1) + [(0, pad)])


# ----------------------------------------------------------------------------
# Kernels (one fused kernel per network mode, two operands each)
# ----------------------------------------------------------------------------
def _linear_mode_kernel(z_ref, w_ref, o_ref, *, in_dim, H, offs):
    """Fused: input Linear+ReLU -> 2x Linear+ReLU -> concatenated heads.

    w_ref is one [rows, cp] slab: Win | Wl1 | Wl2 | Wout | bin,bl1,bl2,bout
    (each block zero-padded to cp lanes; only lanes [:H] of the hidden
    activations are meaningful and are re-sliced after every dot).
    """
    f32 = jnp.float32
    r_win, r_wl1, r_wl2, r_wout, r_vec = offs
    vec = w_ref[r_vec:r_vec + 4, :]
    b_in, b_l1, b_l2 = vec[0:1, :H], vec[1:2, :H], vec[2:3, :H]
    b_out = vec[3:4, :]

    h = jnp.maximum(jnp.dot(z_ref[...], w_ref[r_win:r_win + in_dim, :],
                            preferred_element_type=f32)[:, :H] + b_in, 0.0)
    h = jnp.maximum(jnp.dot(h, w_ref[r_wl1:r_wl1 + H, :],
                            preferred_element_type=f32)[:, :H] + b_l1, 0.0)
    h = jnp.maximum(jnp.dot(h, w_ref[r_wl2:r_wl2 + H, :],
                            preferred_element_type=f32)[:, :H] + b_l2, 0.0)
    o_ref[...] = jnp.dot(h, w_ref[r_wout:r_wout + H, :],
                         preferred_element_type=f32) + b_out


def _fused_transformer_kernel(z_ref, w_ref, o_ref, *, in_dim, H, L, offs,
                              eps=1e-5):
    """Fused: input dense + all TransformerDecoder layers (seq len == 1,
    norm_first=False, eval) + output heads.  One pallas_call, one weight slab.

    Slab row blocks (all zero-padded to cp lanes):
      Win[in_dim]  Wsa_cat[H] (lanes L*H)  Wca_cat[H]  W1_cat[H] (lanes L*2H)
      W2_stack[L*2H]  Wout[H]  vec rows: bin, lb1_cat, bout, then per layer
      (bvo_sa, bvo_ca, b2, g1, be1, g2, be2, g3, be3).
    """
    f32 = jnp.float32
    F = 2 * H
    r_win, r_wsa, r_wca, r_w1, r_w2, r_wout, r_vec = offs

    win = w_ref[r_win:r_win + in_dim, :]
    wsa = w_ref[r_wsa:r_wsa + H, :]
    wca = w_ref[r_wca:r_wca + H, :]
    w1 = w_ref[r_w1:r_w1 + H, :]
    wout = w_ref[r_wout:r_wout + H, :]
    vec = w_ref[r_vec:r_vec + 3 + 9 * L, :]

    b_in = vec[0:1, :H]
    lb1 = vec[1:2, :]
    b_out = vec[2:3, :]

    def ln(h, g, b):
        # Fused statistics: mu and E[x^2] are independent reductions,
        # var = E[x^2] - mu^2 -> one dependent XLU pass instead of two.
        mu = jnp.mean(h, axis=-1, keepdims=True)
        var = jnp.mean(h * h, axis=-1, keepdims=True) - mu * mu
        return (h - mu) * jax.lax.rsqrt(var + eps) * g + b

    x = jnp.maximum(jnp.dot(z_ref[...], win, preferred_element_type=f32)[:, :H]
                    + b_in, 0.0)
    mem = x  # transformer(z, z): memory == input of the first layer

    # Cross-attention depends only on `mem` (constant): hoist all L folded
    # V@out_proj matmuls out of the loop as one lane-concatenated dot.
    ca_all = jnp.dot(mem, wca, preferred_element_type=f32)

    for l in range(L):
        base = 3 + 9 * l
        bvo_sa = vec[base + 0:base + 1, :H]
        bvo_ca = vec[base + 1:base + 2, :H]
        b2 = vec[base + 2:base + 3, :H]
        g1, be1 = vec[base + 3:base + 4, :H], vec[base + 4:base + 5, :H]
        g2, be2 = vec[base + 5:base + 6, :H], vec[base + 6:base + 7, :H]
        g3, be3 = vec[base + 7:base + 8, :H], vec[base + 8:base + 9, :H]

        # Self-attention: single key -> softmax == 1 -> folded out_proj(V(x)).
        sa = jnp.dot(x, wsa, preferred_element_type=f32)[:, l * H:(l + 1) * H] \
            + bvo_sa
        x = ln(x + sa, g1, be1)
        # Cross-attention: precomputed above, sliced per layer.
        ca = ca_all[:, l * H:(l + 1) * H] + bvo_ca
        x = ln(x + ca, g2, be2)
        # Feed-forward: lane-concatenated W1/b1, row-stacked per-layer W2.
        h1 = jnp.maximum(jnp.dot(x, w1, preferred_element_type=f32) + lb1,
                         0.0)[:, l * F:(l + 1) * F]
        w2_l = w_ref[r_w2 + l * F:r_w2 + (l + 1) * F, :]
        ff = jnp.dot(h1, w2_l, preferred_element_type=f32)[:, :H] + b2
        x = ln(x + ff, g3, be3)

    o_ref[...] = jnp.dot(x, wout, preferred_element_type=f32) + b_out


def _simple_n2_kernel(zf_ref, wp_ref, o_ref, *, K):
    """'simple' mode for N == 2: joint one-hot outer product built in VMEM.

    joint[b, i*K + j] = z0[b, i] * z1[b, j].  Both expansions go through the
    MXU against 0/1 iota-built matrices (no per-column lane-broadcast loop),
    then one [B, K*K] @ [K*K, cp] dot against the un-swizzled padded Wp.
    The [B, K**N] joint never touches HBM.
    """
    f32 = jnp.float32
    zf = zf_ref[...]
    z0 = zf[:, :K]
    z1 = zf[:, K:2 * K]
    col = jax.lax.broadcasted_iota(jnp.int32, (K, K * K), 1)
    row = jax.lax.broadcasted_iota(jnp.int32, (K, K * K), 0)
    e0 = (col // K == row).astype(f32)   # repeat-each-element K times
    e1 = (col % K == row).astype(f32)    # tile K times
    joint = (jnp.dot(z0, e0, preferred_element_type=f32) *
             jnp.dot(z1, e1, preferred_element_type=f32))      # [B, K*K]
    o_ref[...] = jnp.dot(joint, wp_ref[...], preferred_element_type=f32)


def _matmul_nobias_kernel(x_ref, w_ref, o_ref):
    o_ref[...] = jnp.dot(x_ref[...], w_ref[...],
                         preferred_element_type=jnp.float32)


# ----------------------------------------------------------------------------
# Glue + parameter packing (one-time, outside the hot path)
# ----------------------------------------------------------------------------
def batch_outer_product(t):
    """Glue (broadcast/reshape only): [B, N, K] -> [B, K**N]."""
    B, N, K = t.shape
    result = t[:, 0, :]
    for i in range(1, N):
        result = (result[:, :, None] * t[:, i, None, :]).reshape(B, -1)
    assert result.shape == (B, K ** N)
    return result


def pack_params(params, category_dims, latent_shape):
    """Repack all parameters into one lane-dense [rows, cp] slab per mode.

    Folds V@out_proj per attention block, lane-concatenates per-layer weights,
    and zero-pads every block to cp (>=128) lanes so all loads are unmasked.
    """
    N, K = latent_shape
    in_dim = N * K
    H = params['Win'].shape[1]
    ctot = int(sum(category_dims))
    cp = max(LANE, _round_up(ctot, LANE))

    packed = {'ctot': ctot, 'cp': cp, 'H': H, 'in_dim': in_dim}

    # ---- 'linear' mode: Win | Wl1 | Wl2 | Wout | 4 bias rows --------------
    lin_w = [_pad_last(params['Win'], cp), _pad_last(params['Wl1'], cp),
             _pad_last(params['Wl2'], cp), _pad_last(params['Wout'], cp)]
    lin_b = [_pad_last(params['bin'], cp), _pad_last(params['bl1'], cp),
             _pad_last(params['bl2'], cp), _pad_last(params['bout'], cp)]
    r, lin_offs = 0, []
    for blk in lin_w:
        lin_offs.append(r)
        r += blk.shape[0]
    lin_offs.append(r)  # bias-row block offset
    packed['lin_slab'] = jnp.concatenate(lin_w + lin_b, axis=0)
    packed['lin_offs'] = tuple(lin_offs)

    # ---- 'transformer' mode ------------------------------------------------
    layers = params['layers']
    L = len(layers)
    F = 2 * H
    assert L * H <= cp and L * F <= cp, "lane-concat width exceeds slab width"
    packed['L'] = L

    wsa_cat = jnp.concatenate([lp['Wv_sa'] @ lp['Wo_sa'] for lp in layers], 1)
    wca_cat = jnp.concatenate([lp['Wv_ca'] @ lp['Wo_ca'] for lp in layers], 1)
    w1_cat = jnp.concatenate([lp['W1'] for lp in layers], 1)       # [H, L*F]
    w2_stack = jnp.concatenate([lp['W2'] for lp in layers], 0)     # [L*F, H]
    lb1_cat = jnp.concatenate([lp['b1'] for lp in layers], 1)      # [1, L*F]

    vec_rows = [_pad_last(params['bin'], cp), _pad_last(lb1_cat, cp),
                _pad_last(params['bout'], cp)]
    for lp in layers:
        bvo_sa = lp['bv_sa'] @ lp['Wo_sa'] + lp['bo_sa']
        bvo_ca = lp['bv_ca'] @ lp['Wo_ca'] + lp['bo_ca']
        for v in (bvo_sa, bvo_ca, lp['b2'], lp['g1'], lp['be1'],
                  lp['g2'], lp['be2'], lp['g3'], lp['be3']):
            vec_rows.append(_pad_last(v, cp))

    tr_blocks = [_pad_last(params['Win'], cp), _pad_last(wsa_cat, cp),
                 _pad_last(wca_cat, cp), _pad_last(w1_cat, cp),
                 _pad_last(w2_stack, cp), _pad_last(params['Wout'], cp)]
    r, tr_offs = 0, []
    for blk in tr_blocks:
        tr_offs.append(r)
        r += blk.shape[0]
    tr_offs.append(r)  # vector-row block offset
    packed['tr_slab'] = jnp.concatenate(tr_blocks + vec_rows, axis=0)
    packed['tr_offs'] = tuple(tr_offs)

    # ---- 'simple' mode -----------------------------------------------------
    packed['Wp'] = _pad_last(params['Wp'], cp)      # [K**N, cp]
    return packed


def decoder_forward(z, packed, category_dims, network):
    B = z.shape[0]
    ctot, cp = packed['ctot'], packed['cp']
    H, in_dim = packed['H'], packed['in_dim']

    if network == 'linear':
        logits_all = pl.pallas_call(
            functools.partial(_linear_mode_kernel, in_dim=in_dim, H=H,
                              offs=packed['lin_offs']),
            out_shape=jax.ShapeDtypeStruct((B, cp), jnp.float32),
            in_specs=[VMEM_SPEC, VMEM_SPEC],
            out_specs=VMEM_SPEC,
        )(z.reshape(B, -1), packed['lin_slab'])

    elif network == 'transformer':
        logits_all = pl.pallas_call(
            functools.partial(_fused_transformer_kernel, in_dim=in_dim, H=H,
                              L=packed['L'], offs=packed['tr_offs']),
            out_shape=jax.ShapeDtypeStruct((B, cp), jnp.float32),
            in_specs=[VMEM_SPEC, VMEM_SPEC],
            out_specs=VMEM_SPEC,
        )(z.reshape(B, -1), packed['tr_slab'])

    elif network == 'simple':
        N, K = z.shape[1], z.shape[2]
        if N == 2:
            logits_all = pl.pallas_call(
                functools.partial(_simple_n2_kernel, K=K),
                out_shape=jax.ShapeDtypeStruct((B, cp), jnp.float32),
                in_specs=[VMEM_SPEC, VMEM_SPEC],
                out_specs=VMEM_SPEC,
            )(z.reshape(B, -1), packed['Wp'])
        else:
            # TODO(synk): for N > 2 / large K**N, build the joint per-tile in
            # VMEM with a grid over the K**N contraction dim + f32 accumulator.
            joint = batch_outer_product(z)
            logits_all = pl.pallas_call(
                _matmul_nobias_kernel,
                out_shape=jax.ShapeDtypeStruct((B, cp), jnp.float32),
                in_specs=[VMEM_SPEC, VMEM_SPEC],
                out_specs=VMEM_SPEC,
            )(joint, packed['Wp'])
    else:
        raise Exception

    logits_all = logits_all[:, :ctot]      # drop lane padding before splitting
    splits = np.cumsum(np.asarray(category_dims))[:-1].tolist()
    logits = jnp.split(logits_all, splits, axis=-1)
    # torch computes probabilities = softmax(logits) and discards them -> skipped.
    return logits


# ----------------------------------------------------------------------------
# Deterministic parameter init (weights stored [in, out]; biases [1, out])
# ----------------------------------------------------------------------------
def _linear_init(key, fan_in, fan_out):
    kw, kb = jax.random.split(key)
    bound = 1.0 / float(np.sqrt(fan_in))
    W = jax.random.uniform(kw, (fan_in, fan_out), jnp.float32, -bound, bound)
    b = jax.random.uniform(kb, (1, fan_out), jnp.float32, -bound, bound)
    return W, b


def _init_tlayer(key, H):
    ks = jax.random.split(key, 6)
    p = {}
    p['Wv_sa'], p['bv_sa'] = _linear_init(ks[0], H, H)
    p['Wo_sa'], p['bo_sa'] = _linear_init(ks[1], H, H)
    p['Wv_ca'], p['bv_ca'] = _linear_init(ks[2], H, H)
    p['Wo_ca'], p['bo_ca'] = _linear_init(ks[3], H, H)
    p['W1'], p['b1'] = _linear_init(ks[4], H, 2 * H)
    p['W2'], p['b2'] = _linear_init(ks[5], 2 * H, H)
    for name in ('g1', 'g2', 'g3'):
        p[name] = jnp.ones((1, H), jnp.float32)
    for name in ('be1', 'be2', 'be3'):
        p[name] = jnp.zeros((1, H), jnp.float32)
    return p


def init_params(key, category_dims, latent_shape, hidden_dim):
    N, K = latent_shape
    in_dim = N * K
    joint_dim = K ** N
    keys = jax.random.split(key, 6)
    params = {}
    params['Win'], params['bin'] = _linear_init(keys[0], in_dim, hidden_dim)
    params['Wl1'], params['bl1'] = _linear_init(keys[1], hidden_dim, hidden_dim)
    params['Wl2'], params['bl2'] = _linear_init(keys[2], hidden_dim, hidden_dim)
    hkeys = jax.random.split(keys[3], len(category_dims))
    wouts, bouts = [], []
    for k, cd in zip(hkeys, category_dims):
        W, b = _linear_init(k, hidden_dim, cd)
        wouts.append(W)
        bouts.append(b)
    params['Wout'] = jnp.concatenate(wouts, axis=1)
    params['bout'] = jnp.concatenate(bouts, axis=1)
    pkeys = jax.random.split(keys[4], len(category_dims))
    params['Wp'] = jnp.concatenate(
        [_linear_init(k, joint_dim, cd)[0] for k, cd in zip(pkeys, category_dims)],
        axis=1)
    params['layers'] = [_init_tlayer(k, hidden_dim) for k in jax.random.split(keys[5], 2)]
    return params


# ----------------------------------------------------------------------------
# Pure-JAX reference (unfused / unfolded math) for correctness checking
# ----------------------------------------------------------------------------
def _ref_tlayer(x, mem, p):
    def ln(h, g, b):
        mu = h.mean(-1, keepdims=True)
        var = ((h - mu) ** 2).mean(-1, keepdims=True)
        return (h - mu) / jnp.sqrt(var + 1e-5) * g + b
    sa = (x @ p['Wv_sa'] + p['bv_sa']) @ p['Wo_sa'] + p['bo_sa']
    x = ln(x + sa, p['g1'], p['be1'])
    ca = (mem @ p['Wv_ca'] + p['bv_ca']) @ p['Wo_ca'] + p['bo_ca']
    x = ln(x + ca, p['g2'], p['be2'])
    ff = jnp.maximum(x @ p['W1'] + p['b1'], 0.0) @ p['W2'] + p['b2']
    return ln(x + ff, p['g3'], p['be3'])


def ref_forward(z, params, category_dims, network):
    B = z.shape[0]
    if network == 'linear':
        h = jnp.maximum(z.reshape(B, -1) @ params['Win'] + params['bin'], 0.0)
        h = jnp.maximum(h @ params['Wl1'] + params['bl1'], 0.0)
        h = jnp.maximum(h @ params['Wl2'] + params['bl2'], 0.0)
        logits_all = h @ params['Wout'] + params['bout']
    elif network == 'transformer':
        h = jnp.maximum(z.reshape(B, -1) @ params['Win'] + params['bin'], 0.0)
        mem = h
        for lp in params['layers']:
            h = _ref_tlayer(h, mem, lp)
        logits_all = h @ params['Wout'] + params['bout']
    elif network == 'simple':
        logits_all = batch_outer_product(z) @ params['Wp']
    else:
        raise Exception
    splits = np.cumsum(np.asarray(category_dims))[:-1].tolist()
    return jnp.split(logits_all, splits, axis=-1)


# ----------------------------------------------------------------------------
if __name__ == "__main__":
    # NOTE: default (not 'highest') matmul precision everywhere, per the perf
    # review: single-pass bf16 MXU inputs with f32 accumulation.  Both the
    # kernel and the pure-JAX reference use it, so the comparison tolerance
    # below is loosened to 5e-2.
    B, N, K, H = 8, 2, 16, 32            # latent_shape = (N, K) = (2, 16)
    category_dims = (3, 5, 4)

    key = jax.random.PRNGKey(0)
    kz, kp = jax.random.split(key)
    z = jax.random.normal(kz, (B, N, K), jnp.float32)
    params = init_params(kp, category_dims, (N, K), H)
    packed = pack_params(params, category_dims, (N, K))

    # 'simple' mode expects one-hot rows (docstring); math works either way.
    z_onehot = jax.nn.one_hot(jnp.argmax(z, axis=-1), K, dtype=jnp.float32)

    for network, zin in (('linear', z), ('transformer', z), ('simple', z_onehot)):
        logits = decoder_forward(zin, packed, category_dims, network)
        logits = jax.block_until_ready(logits)
        ref = ref_forward(zin, params, category_dims, network)
        for l, r, cd in zip(logits, ref, category_dims):
            assert l.shape == (B, cd), (network, l.shape, cd)
            np.testing.assert_allclose(np.asarray(l), np.asarray(r),
                                       rtol=5e-2, atol=5e-2)

    print("KERNEL_OK")
</pallas_src>

<mosaic_0001>
module attributes {stable_mosaic.version = 11 : i64} {
  func.func @_linear_mode_kernel(%arg0: memref<8x32xf32, #tpu.memory_space<vmem>>, %arg1: memref<132x128xf32, #tpu.memory_space<vmem>>, %arg2: memref<8x128xf32, #tpu.memory_space<vmem>>) attributes {dimension_semantics = [], scalar_prefetch = 0 : i64, scratch_operands = 0 : i64, tpu.core_type = #tpu.core_type<tc>} {
    %c128 = arith.constant 128 : index
    %c0 = arith.constant 0 : index
    %0 = vector.load %arg1[%c128, %c0] : memref<132x128xf32, #tpu.memory_space<vmem>>, vector<4x128xf32>
    %1 = vector.extract_strided_slice %0 {offsets = [0, 0], sizes = [1, 32], strides = [1, 1]} : vector<4x128xf32> to vector<1x32xf32>
    %2 = vector.extract_strided_slice %0 {offsets = [1, 0], sizes = [1, 32], strides = [1, 1]} : vector<4x128xf32> to vector<1x32xf32>
    %3 = vector.extract_strided_slice %0 {offsets = [2, 0], sizes = [1, 32], strides = [1, 1]} : vector<4x128xf32> to vector<1x32xf32>
    %4 = vector.extract_strided_slice %0 {offsets = [3, 0], sizes = [1, 128], strides = [1, 1]} : vector<4x128xf32> to vector<1x128xf32>
    %c0_0 = arith.constant 0 : index
    %c0_1 = arith.constant 0 : index
    %5 = vector.load %arg0[%c0_0, %c0_1] : memref<8x32xf32, #tpu.memory_space<vmem>>, vector<8x32xf32>
    %c0_2 = arith.constant 0 : index
    %c0_3 = arith.constant 0 : index
    %6 = vector.load %arg1[%c0_2, %c0_3] : memref<132x128xf32, #tpu.memory_space<vmem>>, vector<32x128xf32>
    %cst = arith.constant dense<0.000000e+00> : vector<8x128xf32>
    %7 = tpu.matmul %5, %6, %cst {dimension_numbers = #tpu.dot_dimension_numbers<[1], [0], [0], [1], [0, 0, 1, 1], [], []>} : vector<8x32xf32>, vector<32x128xf32>, vector<8x128xf32> -> vector<8x128xf32>
    %8 = vector.extract_strided_slice %7 {offsets = [0, 0], sizes = [8, 32], strides = [1, 1]} : vector<8x128xf32> to vector<8x32xf32>
    %9 = vector.broadcast %1 : vector<1x32xf32> to vector<8x32xf32>
    %10 = arith.addf %8, %9 : vector<8x32xf32>
    %cst_4 = arith.constant 0.000000e+00 : f32
    %11 = vector.broadcast %cst_4 : f32 to vector<8x32xf32>
    %12 = arith.maximumf %10, %11 : vector<8x32xf32>
    %c32 = arith.constant 32 : index
    %c0_5 = arith.constant 0 : index
    %13 = vector.load %arg1[%c32, %c0_5] : memref<132x128xf32, #tpu.memory_space<vmem>>, vector<32x128xf32>
    %cst_6 = arith.constant dense<0.000000e+00> : vector<8x128xf32>
    %14 = tpu.matmul %12, %13, %cst_6 {dimension_numbers = #tpu.dot_dimension_numbers<[1], [0], [0], [1], [0, 0, 1, 1], [], []>} : vector<8x32xf32>, vector<32x128xf32>, vector<8x128xf32> -> vector<8x128xf32>
    %15 = vector.extract_strided_slice %14 {offsets = [0, 0], sizes = [8, 32], strides = [1, 1]} : vector<8x128xf32> to vector<8x32xf32>
    %16 = vector.broadcast %2 : vector<1x32xf32> to vector<8x32xf32>
    %17 = arith.addf %15, %16 : vector<8x32xf32>
    %cst_7 = arith.constant 0.000000e+00 : f32
    %18 = vector.broadcast %cst_7 : f32 to vector<8x32xf32>
    %19 = arith.maximumf %17, %18 : vector<8x32xf32>
    %c64 = arith.constant 64 : index
    %c0_8 = arith.constant 0 : index
    %20 = vector.load %arg1[%c64, %c0_8] : memref<132x128xf32, #tpu.memory_space<vmem>>, vector<32x128xf32>
    %cst_9 = arith.constant dense<0.000000e+00> : vector<8x128xf32>
    %21 = tpu.matmul %19, %20, %cst_9 {dimension_numbers = #tpu.dot_dimension_numbers<[1], [0], [0], [1], [0, 0, 1, 1], [], []>} : vector<8x32xf32>, vector<32x128xf32>, vector<8x128xf32> -> vector<8x128xf32>
    %22 = vector.extract_strided_slice %21 {offsets = [0, 0], sizes = [8, 32], strides = [1, 1]} : vector<8x128xf32> to vector<8x32xf32>
    %23 = vector.broadcast %3 : vector<1x32xf32> to vector<8x32xf32>
    %24 = arith.addf %22, %23 : vector<8x32xf32>
    %cst_10 = arith.constant 0.000000e+00 : f32
    %25 = vector.broadcast %cst_10 : f32 to vector<8x32xf32>
    %26 = arith.maximumf %24, %25 : vector<8x32xf32>
    %c96 = arith.constant 96 : index
    %c0_11 = arith.constant 0 : index
    %27 = vector.load %arg1[%c96, %c0_11] : memref<132x128xf32, #tpu.memory_space<vmem>>, vector<32x128xf32>
    %cst_12 = arith.constant dense<0.000000e+00> : vector<8x128xf32>
    %28 = tpu.matmul %26, %27, %cst_12 {dimension_numbers = #tpu.dot_dimension_numbers<[1], [0], [0], [1], [0, 0, 1, 1], [], []>} : vector<8x32xf32>, vector<32x128xf32>, vector<8x128xf32> -> vector<8x128xf32>
    %29 = vector.broadcast %4 : vector<1x128xf32> to vector<8x128xf32>
    %30 = arith.addf %28, %29 : vector<8x128xf32>
    %c0_13 = arith.constant 0 : index
    %c0_14 = arith.constant 0 : index
    %31 = vector.load %arg2[%c0_13, %c0_14] : memref<8x128xf32, #tpu.memory_space<vmem>>, vector<8x128xf32>
    tpu.vector_store %arg2[%c0_13, %c0_14], %30 {strides = array<i32>} : memref<8x128xf32, #tpu.memory_space<vmem>>, vector<8x128xf32>,
    return
  }
}

</mosaic_0001>

<llo_original>
// kernel: tpu_custom_call.1
$region0: #{tpu_custom_call.1}
  #allocation0 [shape = 'u32[]', space=smem, size = 0x4, offset = 0x4, fixed_abs, tag = 'smem constant byte address 0x4 - core index']
  #allocation1 [shape = 'u32[144,128]{1,0:T(1,128)}', space=vmem, size = 0x12000, scoped, tag = 'internal scratch']
  %s0 = inlined_call_operand.hbm [shape: f32[8,32], index: 0, kind: input, shape index: {}]
  %s1 = inlined_call_operand.hbm [shape: f32[132,128], index: 1, kind: input, shape index: {}]
  %s2 = inlined_call_operand.hbm [shape: f32[8,128], index: 2, kind: output, shape index: {}]
  %s3 = sld [smem:[#allocation0]]
  $region26: #{tpu_custom_call.1} parent=0
    _
  %s5 = ssub.s32 1, %s3
  %s6 = scalar_select 0, %s5, %s3
  $region1: #{tpu_custom_call.1} parent=0
    #allocation2 [shape = 'u8[4096]{0}', space=vmem, size = 0x1000, scoped, tag = 'input window, operand 0, single buffered']
    #allocation3 [shape = 's32[1]{0}', space=sflag, size = 0x4, scoped, tag = 'scoped memory for tpu_custom_call.1']
    #allocation4 [shape = 's32[1]{0}', space=sflag, size = 0x4, scoped, tag = 'scoped memory for tpu_custom_call.1']
    #allocation5 [shape = 'u8[69632]{0}', space=vmem, size = 0x11000, scoped, tag = 'input window, operand 1, single buffered']
    #allocation6 [shape = 's32[1]{0}', space=sflag, size = 0x4, scoped, tag = 'scoped memory for tpu_custom_call.1']
    #allocation7 [shape = 'u8[4096]{0}', space=vmem, size = 0x1000, scoped, tag = 'output window, operand 0, single buffered']
    %7 = vsyncpa [#allocation3], 0
    %8 = vsyncpa [#allocation6], 0
    %9 = vsyncpa [#allocation4], 0
    // Predicated region
    $region2: #{tpu_custom_call.1} parent=1 // pred_check
      _
    $region3: #{tpu_custom_call.1} parent=1 // pred_check_branch
      %11 = sbr.rel (0) target = $region5
    $region4: #{tpu_custom_call.1} parent=1 // pred_region
      %s13 = ssub.s32 128, 128
      %14 = vsyncadd [#allocation3], %s13
      %s16 = sshll.u32 [#allocation2], 4
      %s17 = int_to_ptr.vmem [resolvable:$true] %s16
      %19 = dma.hbm_to_vmem [thread:$0]  %s0, 128, %s17, [#allocation3]
    $region5: #{tpu_custom_call.1} parent=1 // pred_fallthru
      _
    // Predicated region
    $region6: #{tpu_custom_call.1} parent=1 // pred_check
      _
    $region7: #{tpu_custom_call.1} parent=1 // pred_check_branch
      %21 = sbr.rel (0) target = $region9
    $region8: #{tpu_custom_call.1} parent=1 // pred_region
      %s23 = ssub.s32 2176, 2176
      %24 = vsyncadd [#allocation6], %s23
      %s25 = sshll.u32 [#allocation5], 4
      %s26 = int_to_ptr.vmem [resolvable:$true] %s25
      %31 = dma.hbm_to_vmem [thread:$0]  %s1, 2176, %s26, [#allocation6], 128, 128, 8
    $region9: #{tpu_custom_call.1} parent=1 // pred_fallthru
      _
    // Predicated region
    $region10: #{tpu_custom_call.1} parent=1 // pred_check
      _
    $region11: #{tpu_custom_call.1} parent=1 // pred_check_branch
      %33 = sbr.rel (0) target = $region13
    $region12: #{tpu_custom_call.1} parent=1 // pred_region
      %34 = dma.done [#allocation3], 128
    $region13: #{tpu_custom_call.1} parent=1 // pred_fallthru
      _
    // Predicated region
    $region14: #{tpu_custom_call.1} parent=1 // pred_check
      _
    $region15: #{tpu_custom_call.1} parent=1 // pred_check_branch
      %36 = sbr.rel (0) target = $region17
    $region16: #{tpu_custom_call.1} parent=1 // pred_region
      %37 = dma.done [#allocation6], 2176
    $region17: #{tpu_custom_call.1} parent=1 // pred_fallthru
      _
    %v38 = vld [vmem:[#allocation5 + $0x80] sm:$0xf]
    %v39 = vld [vmem:[#allocation2] sm:$0xff]
    %v40 = vld [vmem:[#allocation5] sm:$0xff]
    %v41 = vld [vmem:[#allocation5 + $0x8] sm:$0xff]
    %v42 = vld [vmem:[#allocation5 + $0x10] sm:$0xff]
    %v43 = vld [vmem:[#allocation5 + $0x18] sm:$0xff]
    %vm44 = vcmask 261120
    %v46 = vsel %vm44, %v39, 0
    %48 = vmatprep.subr.mxu0 0.0
    %49 = vmatpush1.msra.mxu0 %v40
    %50 = vmatprep.subr.mxu0 0.0
    %51 = vmatpush1.msra.mxu0 %v41
    %52 = vmatprep.subr.mxu0 0.0
    %53 = vmatpush1.msra.mxu0 %v42
    %54 = vmatprep.subr.mxu0 0.0
    %55 = vmatpush1.msra.mxu0 %v43
    %56 = vmatprep.subr.mxu0 0.0
    %57 = vmatpush1.msra.mxu0 0.0
    %58 = vmatprep.subr.mxu0 0.0
    %59 = vmatpush1.msra.mxu0 0.0
    %60 = vmatprep.subr.mxu0 0.0
    %61 = vmatpush1.msra.mxu0 0.0
    %62 = vmatprep.subr.mxu0 0.0
    %63 = vmatpush1.msra.mxu0 0.0
    %64 = vmatprep.subr.mxu0 0.0
    %65 = vmatpush1.msra.mxu0 0.0
    %66 = vmatprep.subr.mxu0 0.0
    %67 = vmatpush1.msra.mxu0 0.0
    %68 = vmatprep.subr.mxu0 0.0
    %69 = vmatpush1.msra.mxu0 0.0
    %70 = vmatprep.subr.mxu0 0.0
    %71 = vmatpush1.msra.mxu0 0.0
    %72 = vmatprep.subr.mxu0 0.0
    %73 = vmatpush1.msra.mxu0 0.0
    %74 = vmatprep.subr.mxu0 0.0
    %75 = vmatpush1.msra.mxu0 0.0
    %76 = vmatprep.subr.mxu0 0.0
    %77 = vmatpush1.msra.mxu0 0.0
    %78 = vmatprep.subr.mxu0 0.0
    %79 = vmatpush1.msra.mxu0 0.0
    %80 = vmatprep.subr.mxu0 0.0
    %81 = vmatpush1.msra.mxu0 0.0
    %82 = vmatprep.subr.mxu0 0.0
    %83 = vmatpush1.msra.mxu0 0.0
    %84 = vmatprep.subr.mxu0 0.0
    %85 = vmatpush1.msra.mxu0 0.0
    %86 = vmatprep.subr.mxu0 0.0
    %87 = vmatpush1.msra.mxu0 0.0
    %88 = vmatprep.subr.mxu0 0.0
    %89 = vmatpush1.msra.mxu0 0.0
    %90 = vmatprep.subr.mxu0 0.0
    %91 = vmatpush1.msra.mxu0 0.0
    %92 = vmatprep.subr.mxu0 0.0
    %93 = vmatpush1.msra.mxu0 0.0
    %94 = vmatprep.subr.mxu0 0.0
    %95 = vmatpush1.msra.mxu0 0.0
    %96 = vmatprep.subr.mxu0 0.0
    %97 = vmatpush1.msra.mxu0 0.0
    %98 = vmatprep.subr.mxu0 0.0
    %99 = vmatpush1.msra.mxu0 0.0
    %100 = vmatprep.subr.mxu0 0.0
    %101 = vmatpush1.msra.mxu0 0.0
    %102 = vmatprep.subr.mxu0 0.0
    %103 = vmatpush1.msra.mxu0 0.0
    %104 = vmatprep.subr.mxu0 0.0
    %105 = vmatpush1.msra.mxu0 0.0
    %106 = vmatprep.subr.mxu0 0.0
    %107 = vmatpush1.msra.mxu0 0.0
    %108 = vmatprep.subr.mxu0 0.0
    %109 = vmatpush1.msra.mxu0 0.0
    %110 = vmatprep.subr.mxu0 0.0
    %111 = vmatpush1.msra.mxu0 0.0
    %112 = vmatprep.mubr.f32.mxu0 0.0
    %113 = vmatmul.mubr.f32.gmra.mrb[0].mxu0 %v46
    %v114 = vpop.f32.mrb[0].mxu0
    %v115 = vadd.f32 0.0, %v114
    %v116 = vpop.f32.mrb[0].mxu0
    %117 = vdwg.mxu0
    %v118 = vlaneseq
    %v119 = vshrl.u32 %v118, 7
    %v120 = vsub.s32 0, %v119
    %v121 = vrot.slane %v38, %v120
    %v122 = vadd.f32 %v115, %v121
    %v123 = vmax.f32 %v122, 0.0
    %v124 = vld [vmem:[#allocation5 + $0x20] sm:$0xff]
    %v125 = vld [vmem:[#allocation5 + $0x28] sm:$0xff]
    %v126 = vld [vmem:[#allocation5 + $0x30] sm:$0xff]
    %v127 = vld [vmem:[#allocation5 + $0x38] sm:$0xff]
    %v129 = vsel %vm44, %v123, 0
    %131 = vmatprep.subr.mxu0 0.0
    %132 = vmatpush1.msra.mxu0 %v124
    %133 = vmatprep.subr.mxu0 0.0
    %134 = vmatpush1.msra.mxu0 %v125
    %135 = vmatprep.subr.mxu0 0.0
    %136 = vmatpush1.msra.mxu0 %v126
    %137 = vmatprep.subr.mxu0 0.0
    %138 = vmatpush1.msra.mxu0 %v127
    %139 = vmatprep.subr.mxu0 0.0
    %140 = vmatpush1.msra.mxu0 0.0
    %141 = vmatprep.subr.mxu0 0.0
    %142 = vmatpush1.msra.mxu0 0.0
    %143 = vmatprep.subr.mxu0 0.0
    %144 = vmatpush1.msra.mxu0 0.0
    %145 = vmatprep.subr.mxu0 0.0
    %146 = vmatpush1.msra.mxu0 0.0
    %147 = vmatprep.subr.mxu0 0.0
    %148 = vmatpush1.msra.mxu0 0.0
    %149 = vmatprep.subr.mxu0 0.0
    %150 = vmatpush1.msra.mxu0 0.0
    %151 = vmatprep.subr.mxu0 0.0
    %152 = vmatpush1.msra.mxu0 0.0
    %153 = vmatprep.subr.mxu0 0.0
    %154 = vmatpush1.msra.mxu0 0.0
    %155 = vmatprep.subr.mxu0 0.0
    %156 = vmatpush1.msra.mxu0 0.0
    %157 = vmatprep.subr.mxu0 0.0
    %158 = vmatpush1.msra.mxu0 0.0
    %159 = vmatprep.subr.mxu0 0.0
    %160 = vmatpush1.msra.mxu0 0.0
    %161 = vmatprep.subr.mxu0 0.0
    %162 = vmatpush1.msra.mxu0 0.0
    %163 = vmatprep.subr.mxu0 0.0
    %164 = vmatpush1.msra.mxu0 0.0
    %165 = vmatprep.subr.mxu0 0.0
    %166 = vmatpush1.msra.mxu0 0.0
    %167 = vmatprep.subr.mxu0 0.0
    %168 = vmatpush1.msra.mxu0 0.0
    %169 = vmatprep.subr.mxu0 0.0
    %170 = vmatpush1.msra.mxu0 0.0
    %171 = vmatprep.subr.mxu0 0.0
    %172 = vmatpush1.msra.mxu0 0.0
    %173 = vmatprep.subr.mxu0 0.0
    %174 = vmatpush1.msra.mxu0 0.0
    %175 = vmatprep.subr.mxu0 0.0
    %176 = vmatpush1.msra.mxu0 0.0
    %177 = vmatprep.subr.mxu0 0.0
    %178 = vmatpush1.msra.mxu0 0.0
    %179 = vmatprep.subr.mxu0 0.0
    %180 = vmatpush1.msra.mxu0 0.0
    %181 = vmatprep.subr.mxu0 0.0
    %182 = vmatpush1.msra.mxu0 0.0
    %183 = vmatprep.subr.mxu0 0.0
    %184 = vmatpush1.msra.mxu0 0.0
    %185 = vmatprep.subr.mxu0 0.0
    %186 = vmatpush1.msra.mxu0 0.0
    %187 = vmatprep.subr.mxu0 0.0
    %188 = vmatpush1.msra.mxu0 0.0
    %189 = vmatprep.subr.mxu0 0.0
    %190 = vmatpush1.msra.mxu0 0.0
    %191 = vmatprep.subr.mxu0 0.0
    %192 = vmatpush1.msra.mxu0 0.0
    %193 = vmatprep.subr.mxu0 0.0
    %194 = vmatpush1.msra.mxu0 0.0
    %195 = vmatprep.mubr.f32.mxu0 0.0
    %196 = vmatmul.mubr.f32.gmra.mrb[0].mxu0 %v129
    %v197 = vpop.f32.mrb[0].mxu0
    %v198 = vadd.f32 0.0, %v197
    %v199 = vpop.f32.mrb[0].mxu0
    %200 = vdwg.mxu0
    %v201 = vlaneseq
    %v202 = vshrl.u32 %v201, 7
    %v203 = vsub.s32 1, %v202
    %v204 = vrot.slane %v38, %v203
    %v205 = vadd.f32 %v198, %v204
    %v206 = vmax.f32 %v205, 0.0
    %v207 = vld [vmem:[#allocation5 + $0x40] sm:$0xff]
    %v208 = vld [vmem:[#allocation5 + $0x48] sm:$0xff]
    %v209 = vld [vmem:[#allocation5 + $0x50] sm:$0xff]
    %v210 = vld [vmem:[#allocation5 + $0x58] sm:$0xff]
    %v212 = vsel %vm44, %v206, 0
    %214 = vmatprep.subr.mxu0 0.0
    %215 = vmatpush1.msra.mxu0 %v207
    %216 = vmatprep.subr.mxu0 0.0
    %217 = vmatpush1.msra.mxu0 %v208
    %218 = vmatprep.subr.mxu0 0.0
    %219 = vmatpush1.msra.mxu0 %v209
    %220 = vmatprep.subr.mxu0 0.0
    %221 = vmatpush1.msra.mxu0 %v210
    %222 = vmatprep.subr.mxu0 0.0
    %223 = vmatpush1.msra.mxu0 0.0
    %224 = vmatprep.subr.mxu0 0.0
    %225 = vmatpush1.msra.mxu0 0.0
    %226 = vmatprep.subr.mxu0 0.0
    %227 = vmatpush1.msra.mxu0 0.0
    %228 = vmatprep.subr.mxu0 0.0
    %229 = vmatpush1.msra.mxu0 0.0
    %230 = vmatprep.subr.mxu0 0.0
    %231 = vmatpush1.msra.mxu0 0.0
    %232 = vmatprep.subr.mxu0 0.0
    %233 = vmatpush1.msra.mxu0 0.0
    %234 = vmatprep.subr.mxu0 0.0
    %235 = vmatpush1.msra.mxu0 0.0
    %236 = vmatprep.subr.mxu0 0.0
    %237 = vmatpush1.msra.mxu0 0.0
    %238 = vmatprep.subr.mxu0 0.0
    %239 = vmatpush1.msra.mxu0 0.0
    %240 = vmatprep.subr.mxu0 0.0
    %241 = vmatpush1.msra.mxu0 0.0
    %242 = vmatprep.subr.mxu0 0.0
    %243 = vmatpush1.msra.mxu0 0.0
    %244 = vmatprep.subr.mxu0 0.0
    %245 = vmatpush1.msra.mxu0 0.0
    %246 = vmatprep.subr.mxu0 0.0
    %247 = vmatpush1.msra.mxu0 0.0
    %248 = vmatprep.subr.mxu0 0.0
    %249 = vmatpush1.msra.mxu0 0.0
    %250 = vmatprep.subr.mxu0 0.0
    %251 = vmatpush1.msra.mxu0 0.0
    %252 = vmatprep.subr.mxu0 0.0
    %253 = vmatpush1.msra.mxu0 0.0
    %254 = vmatprep.subr.mxu0 0.0
    %255 = vmatpush1.msra.mxu0 0.0
    %256 = vmatprep.subr.mxu0 0.0
    %257 = vmatpush1.msra.mxu0 0.0
    %258 = vmatprep.subr.mxu0 0.0
    %259 = vmatpush1.msra.mxu0 0.0
    %260 = vmatprep.subr.mxu0 0.0
    %261 = vmatpush1.msra.mxu0 0.0
    %262 = vmatprep.subr.mxu0 0.0
    %263 = vmatpush1.msra.mxu0 0.0
    %264 = vmatprep.subr.mxu0 0.0
    %265 = vmatpush1.msra.mxu0 0.0
    %266 = vmatprep.subr.mxu0 0.0
    %267 = vmatpush1.msra.mxu0 0.0
    %268 = vmatprep.subr.mxu0 0.0
    %269 = vmatpush1.msra.mxu0 0.0
    %270 = vmatprep.subr.mxu0 0.0
    %271 = vmatpush1.msra.mxu0 0.0
    %272 = vmatprep.subr.mxu0 0.0
    %273 = vmatpush1.msra.mxu0 0.0
    %274 = vmatprep.subr.mxu0 0.0
    %275 = vmatpush1.msra.mxu0 0.0
    %276 = vmatprep.subr.mxu0 0.0
    %277 = vmatpush1.msra.mxu0 0.0
    %278 = vmatprep.mubr.f32.mxu0 0.0
    %279 = vmatmul.mubr.f32.gmra.mrb[0].mxu0 %v212
    %v280 = vpop.f32.mrb[0].mxu0
    %v281 = vadd.f32 0.0, %v280
    %v282 = vpop.f32.mrb[0].mxu0
    %283 = vdwg.mxu0
    %v284 = vlaneseq
    %v285 = vshrl.u32 %v284, 7
    %v286 = vsub.s32 2, %v285
    %v287 = vrot.slane %v38, %v286
    %v288 = vadd.f32 %v281, %v287
    %v289 = vmax.f32 %v288, 0.0
    %v290 = vld [vmem:[#allocation5 + $0x60] sm:$0xff]
    %v291 = vld [vmem:[#allocation5 + $0x68] sm:$0xff]
    %v292 = vld [vmem:[#allocation5 + $0x70] sm:$0xff]
    %v293 = vld [vmem:[#allocation5 + $0x78] sm:$0xff]
    %v294 = vlaneseq
    %v295 = vshrl.u32 %v294, 7
    %v296 = vsub.s32 3, %v295
    %v297 = vrot.slane %v38, %v296
    %v299 = vsel %vm44, %v289, 0
    %301 = vmatprep.subr.mxu0 0.0
    %302 = vmatpush1.msra.mxu0 %v290
    %303 = vmatprep.subr.mxu0 0.0
    %304 = vmatpush1.msra.mxu0 %v291
    %305 = vmatprep.subr.mxu0 0.0
    %306 = vmatpush1.msra.mxu0 %v292
    %307 = vmatprep.subr.mxu0 0.0
    %308 = vmatpush1.msra.mxu0 %v293
    %309 = vmatprep.subr.mxu0 0.0
    %310 = vmatpush1.msra.mxu0 0.0
    %311 = vmatprep.subr.mxu0 0.0
    %312 = vmatpush1.msra.mxu0 0.0
    %313 = vmatprep.subr.mxu0 0.0
    %314 = vmatpush1.msra.mxu0 0.0
    %315 = vmatprep.subr.mxu0 0.0
    %316 = vmatpush1.msra.mxu0 0.0
    %317 = vmatprep.subr.mxu0 0.0
    %318 = vmatpush1.msra.mxu0 0.0
    %319 = vmatprep.subr.mxu0 0.0
    %320 = vmatpush1.msra.mxu0 0.0
    %321 = vmatprep.subr.mxu0 0.0
    %322 = vmatpush1.msra.mxu0 0.0
    %323 = vmatprep.subr.mxu0 0.0
    %324 = vmatpush1.msra.mxu0 0.0
    %325 = vmatprep.subr.mxu0 0.0
    %326 = vmatpush1.msra.mxu0 0.0
    %327 = vmatprep.subr.mxu0 0.0
    %328 = vmatpush1.msra.mxu0 0.0
    %329 = vmatprep.subr.mxu0 0.0
    %330 = vmatpush1.msra.mxu0 0.0
    %331 = vmatprep.subr.mxu0 0.0
    %332 = vmatpush1.msra.mxu0 0.0
    %333 = vmatprep.subr.mxu0 0.0
    %334 = vmatpush1.msra.mxu0 0.0
    %335 = vmatprep.subr.mxu0 0.0
    %336 = vmatpush1.msra.mxu0 0.0
    %337 = vmatprep.subr.mxu0 0.0
    %338 = vmatpush1.msra.mxu0 0.0
    %339 = vmatprep.subr.mxu0 0.0
    %340 = vmatpush1.msra.mxu0 0.0
    %341 = vmatprep.subr.mxu0 0.0
    %342 = vmatpush1.msra.mxu0 0.0
    %343 = vmatprep.subr.mxu0 0.0
    %344 = vmatpush1.msra.mxu0 0.0
    %345 = vmatprep.subr.mxu0 0.0
    %346 = vmatpush1.msra.mxu0 0.0
    %347 = vmatprep.subr.mxu0 0.0
    %348 = vmatpush1.msra.mxu0 0.0
    %349 = vmatprep.subr.mxu0 0.0
    %350 = vmatpush1.msra.mxu0 0.0
    %351 = vmatprep.subr.mxu0 0.0
    %352 = vmatpush1.msra.mxu0 0.0
    %353 = vmatprep.subr.mxu0 0.0
    %354 = vmatpush1.msra.mxu0 0.0
    %355 = vmatprep.subr.mxu0 0.0
    %356 = vmatpush1.msra.mxu0 0.0
    %357 = vmatprep.subr.mxu0 0.0
    %358 = vmatpush1.msra.mxu0 0.0
    %359 = vmatprep.subr.mxu0 0.0
    %360 = vmatpush1.msra.mxu0 0.0
    %361 = vmatprep.subr.mxu0 0.0
    %362 = vmatpush1.msra.mxu0 0.0
    %363 = vmatprep.subr.mxu0 0.0
    %364 = vmatpush1.msra.mxu0 0.0
    %365 = vmatprep.mubr.f32.mxu0 0.0
    %366 = vmatmul.mubr.f32.gmra.mrb[0].mxu0 %v299
    %v367 = vpop.f32.mrb[0].mxu0
    %v368 = vadd.f32 %v297, %v367
    %v369 = vpop.f32.mrb[0].mxu0
    %370 = vdwg.mxu0
    %371 = vst [vmem:[#allocation7] sm:$0xff] %v368
    // Predicated region
    $region18: #{tpu_custom_call.1} parent=1 // pred_check
      _
    $region19: #{tpu_custom_call.1} parent=1 // pred_check_branch
      %373 = sbr.rel (0) target = $region21
    $region20: #{tpu_custom_call.1} parent=1 // pred_region
      %s375 = ssub.s32 128, 128
      %376 = vsyncadd [#allocation4], %s375
      %s378 = sshll.u32 [#allocation7], 4
      %s379 = int_to_ptr.vmem [resolvable:$true] %s378
      %381 = dma.vmem_to_hbm [thread:$0]  %s379, 128, %s2, [#allocation4]
    $region21: #{tpu_custom_call.1} parent=1 // pred_fallthru
      _
    // Predicated region
    $region22: #{tpu_custom_call.1} parent=1 // pred_check
      _
    $region23: #{tpu_custom_call.1} parent=1 // pred_check_branch
      %383 = sbr.rel (0) target = $region25
    $region24: #{tpu_custom_call.1} parent=1 // pred_region
      %384 = dma.done [#allocation4], 128
    $region25: #{tpu_custom_call.1} parent=1 // pred_fallthru
      _
    %385 = vsyncpa [#allocation3], 1
    %386 = vsyncpa [#allocation6], 1
    %387 = vsyncpa [#allocation4], 1

</llo_original>
